<compile_context>
chip_gen: v5e
topology: v5e:2x2
jax: 0.10.0
libtpu: 0.0.40
codegen_flags: <defaults>
</compile_context>

<pallas_src>
import functools
import math

import jax
import jax.numpy as jnp
from jax import lax
from jax.experimental import pallas as pl
from jax.experimental.pallas import tpu as pltpu


_SMALL_TOTAL_BYTES = 2 * 1024 * 1024     # below this, one block is fine
_MIN_BLOCKS = 4                          # 2 blocks per TC; v7x has 2 TCs
_DEFAULT_TILE_BYTES = 2 * 1024 * 1024    # ~2 MiB tiles (roofline plateau)


def _cdiv(a, b):
    return -(-a // b)


def _align_down(x, m):
    return (x // m) * m


def _align_up(x, m):
    return _cdiv(x, m) * m


def _sublane_multiple(dtype):
    bits = jnp.dtype(dtype).itemsize * 8
    return {32: 8, 16: 16, 8: 32}.get(bits, 8)


def _vmem_limit(in_tile_bytes, f32_tile_bytes):
    # double-buffered in + out tiles, f32 widening temps, generous margin
    need = 2 * 2 * in_tile_bytes + 2 * f32_tile_bytes + (4 << 20)
    return int(min(max(need, 16 << 20), 32 << 20))


# --------------------------------------------------------------------------
# Fast path: whole hidden dim in one block, grid over row blocks.
# --------------------------------------------------------------------------
def _scale_norm_kernel(g_ref, x_ref, o_ref, *, eps):
    # g_ref: (1,) f32 in SMEM; x_ref/o_ref: (block_rows, hidden) in VMEM.
    x = x_ref[...]
    xf = x.astype(jnp.float32)
    sq = jnp.sum(xf * xf, axis=-1, keepdims=True)            # (block_rows, 1)
    # max(||x||, eps) == sqrt(max(sumsq, eps^2)) -> one EUP rsqrt, g fused.
    scale = g_ref[0] * lax.rsqrt(jnp.maximum(sq, eps * eps))  # f32
    # Final multiply in f32, single cast to the output dtype.
    o_ref[...] = (xf * scale).astype(o_ref.dtype)


def _pick_block_rows(rows, row_bytes, sub, target_tile_bytes):
    br = max(sub, _align_down(target_tile_bytes // max(row_bytes, 1), sub))
    if rows * row_bytes > _SMALL_TOTAL_BYTES:
        # guarantee at least _MIN_BLOCKS blocks so both v7x TCs and the DMA
        # pipeline are used
        br = min(br, max(sub, _align_down(rows // _MIN_BLOCKS, sub)))
    br = min(br, _align_up(rows, sub))
    # prefer an even number of blocks (balanced megacore tail); bounded search
    n = _cdiv(rows, br)
    tries = 0
    while n > 1 and n % 2 == 1 and br > sub and tries < 64:
        br -= sub
        n = _cdiv(rows, br)
        tries += 1
    return br


def _scale_norm_rowblock(x2, g, eps, block_rows, target_tile_bytes):
    rows, hidden = x2.shape
    itemsize = x2.dtype.itemsize
    grid = (_cdiv(rows, block_rows),)

    in_tile = block_rows * hidden * itemsize
    f32_tile = block_rows * hidden * 4
    cost = pl.CostEstimate(
        flops=3 * rows * hidden,
        transcendentals=rows,
        bytes_accessed=2 * rows * hidden * itemsize + 4,
    )

    kernel = functools.partial(_scale_norm_kernel, eps=float(eps))
    return pl.pallas_call(
        kernel,
        out_shape=jax.ShapeDtypeStruct((rows, hidden), x2.dtype),
        grid=grid,
        in_specs=[
            # scalar gain g lives in SMEM, same for every grid step
            pl.BlockSpec(memory_space=pltpu.MemorySpace.SMEM),
            pl.BlockSpec((block_rows, hidden), lambda i: (i, 0)),
        ],
        out_specs=pl.BlockSpec((block_rows, hidden), lambda i: (i, 0)),
        compiler_params=pltpu.CompilerParams(
            dimension_semantics=("parallel",),
            vmem_limit_bytes=_vmem_limit(in_tile, f32_tile),
        ),
        cost_estimate=cost,
    )(g, x2)


# --------------------------------------------------------------------------
# Wide-hidden fallback: hidden tiled, two passes (reduce scale, then apply).
# --------------------------------------------------------------------------
def _sumsq_scale_kernel(x_ref, s_ref, acc_ref, *, eps, hidden, block_hidden):
    k = pl.program_id(1)

    @pl.when(k == 0)
    def _():
        acc_ref[...] = jnp.zeros_like(acc_ref)

    xf = x_ref[...].astype(jnp.float32)
    if hidden % block_hidden != 0:
        # mask out-of-bounds hidden columns of the partial last block so they
        # cannot pollute the per-row reduction
        col = k * block_hidden + lax.broadcasted_iota(jnp.int32, xf.shape, 1)
        xf = jnp.where(col < hidden, xf, 0.0)
    acc_ref[...] += jnp.sum(xf * xf, axis=-1, keepdims=True)

    @pl.when(k == pl.num_programs(1) - 1)
    def _():
        s_ref[...] = lax.rsqrt(jnp.maximum(acc_ref[...], eps * eps))


def _apply_scale_kernel(g_ref, s_ref, x_ref, o_ref):
    scale = s_ref[...] * g_ref[0]                      # (block_rows, 1) f32
    o_ref[...] = (x_ref[...].astype(jnp.float32) * scale).astype(o_ref.dtype)


def _scale_norm_wide(x2, g, eps, sub, target_tile_bytes):
    rows, hidden = x2.shape
    itemsize = x2.dtype.itemsize

    block_hidden = max(128, _align_down(target_tile_bytes // (sub * itemsize), 128))
    block_hidden = min(block_hidden, _align_down(hidden, 128))
    block_rows = max(sub, _align_down(target_tile_bytes // (block_hidden * itemsize), sub))
    block_rows = min(block_rows, _align_up(rows, sub))

    grid = (_cdiv(rows, block_rows), _cdiv(hidden, block_hidden))
    in_tile = block_rows * block_hidden * itemsize
    f32_tile = block_rows * block_hidden * 4
    vmem_limit = _vmem_limit(in_tile, f32_tile)

    # Pass 1: per-row 1/max(||x||, eps)  (f32, shape (rows, 1))
    sumsq_kernel = functools.partial(
        _sumsq_scale_kernel, eps=float(eps), hidden=hidden, block_hidden=block_hidden)
    inv_norm = pl.pallas_call(
        sumsq_kernel,
        out_shape=jax.ShapeDtypeStruct((rows, 1), jnp.float32),
        grid=grid,
        in_specs=[pl.BlockSpec((block_rows, block_hidden), lambda i, k: (i, k))],
        out_specs=pl.BlockSpec((block_rows, 1), lambda i, k: (i, 0)),
        scratch_shapes=[pltpu.VMEM((block_rows, 1), jnp.float32)],
        compiler_params=pltpu.CompilerParams(
            dimension_semantics=("parallel", "arbitrary"),
            vmem_limit_bytes=vmem_limit,
        ),
        cost_estimate=pl.CostEstimate(
            flops=2 * rows * hidden,
            transcendentals=rows,
            bytes_accessed=rows * hidden * itemsize + rows * 4,
        ),
    )(x2)

    # Pass 2: y = x * (inv_norm * g), streamed with both grid axes parallel.
    out = pl.pallas_call(
        _apply_scale_kernel,
        out_shape=jax.ShapeDtypeStruct((rows, hidden), x2.dtype),
        grid=grid,
        in_specs=[
            pl.BlockSpec(memory_space=pltpu.MemorySpace.SMEM),
            pl.BlockSpec((block_rows, 1), lambda i, j: (i, 0)),
            pl.BlockSpec((block_rows, block_hidden), lambda i, j: (i, j)),
        ],
        out_specs=pl.BlockSpec((block_rows, block_hidden), lambda i, j: (i, j)),
        compiler_params=pltpu.CompilerParams(
            dimension_semantics=("parallel", "parallel"),
            vmem_limit_bytes=vmem_limit,
        ),
        cost_estimate=pl.CostEstimate(
            flops=2 * rows * hidden,
            transcendentals=0,
            bytes_accessed=2 * rows * hidden * itemsize + rows * 4,
        ),
    )(g, inv_norm, x2)
    return out


# --------------------------------------------------------------------------
# Public wrapper
# --------------------------------------------------------------------------
def scale_norm(x, g, eps=1e-5, target_tile_bytes=_DEFAULT_TILE_BYTES):
    """ScaleNorm over the last axis of x. g is a scalar array of shape (1,)."""
    orig_shape = x.shape
    hidden = orig_shape[-1]
    rows = int(math.prod(orig_shape[:-1])) if len(orig_shape) > 1 else 1
    x2 = x.reshape(rows, hidden)
    g32 = g.astype(jnp.float32)

    itemsize = x2.dtype.itemsize
    row_bytes = hidden * itemsize
    sub = _sublane_multiple(x2.dtype)

    use_wide = (sub * row_bytes > target_tile_bytes) and (hidden >= 256)
    if use_wide:
        out = _scale_norm_wide(x2, g32, eps, sub, target_tile_bytes)
    else:
        block_rows = _pick_block_rows(rows, row_bytes, sub, target_tile_bytes)
        out = _scale_norm_rowblock(x2, g32, eps, block_rows, target_tile_bytes)

    return out.reshape(orig_shape)


def scale_norm_ref(x, g, eps=1e-5):
    # Pure-JAX reference mirroring the PyTorch forward.
    n = jnp.sqrt(jnp.sum(x.astype(jnp.float32) ** 2, axis=-1, keepdims=True))
    n = jnp.maximum(n, eps)
    return (x.astype(jnp.float32) / n * g[0]).astype(x.dtype)


if __name__ == "__main__":
    key = jax.random.PRNGKey(0)

    # Parameter init exactly as in the module: g = ones(1)
    g = jnp.ones((1,), dtype=jnp.float32)

    # 1) Small shape consistent with the module's usage (hidden=32 is sub-128;
    #    masked-store penalty accepted for the smoke test).
    x = jax.random.normal(key, (2, 8, 32), dtype=jnp.float32)
    y = jax.block_until_ready(scale_norm(x, g, eps=1e-5))
    y_ref = scale_norm_ref(x, g, eps=1e-5)
    assert y.shape == x.shape and y.dtype == x.dtype
    assert jnp.allclose(y, y_ref, atol=1e-5, rtol=1e-5), "mismatch vs reference"

    # 2) Multi-block grid with masked partial last row-block (even block count).
    x2 = jax.random.normal(jax.random.PRNGKey(1), (4, 90, 256), dtype=jnp.float32)
    y2 = jax.block_until_ready(scale_norm(x2, g, eps=1e-5, target_tile_bytes=128 * 1024))
    assert jnp.allclose(y2, scale_norm_ref(x2, g), atol=1e-5, rtol=1e-5), \
        "mismatch (partial row block)"

    # 3) bf16 path: scale applied in f32, single cast to bf16 at the end.
    x3 = jax.random.normal(jax.random.PRNGKey(2), (2, 128, 256), dtype=jnp.bfloat16)
    y3 = jax.block_until_ready(scale_norm(x3, g, eps=1e-5))
    y3_ref = scale_norm_ref(x3, g)
    assert y3.dtype == jnp.bfloat16
    assert jnp.allclose(y3.astype(jnp.float32), y3_ref.astype(jnp.float32),
                        atol=1e-2, rtol=1e-2), "mismatch (bf16)"

    # 4) Wide-hidden fallback: hidden tiled ("arbitrary" reduction) with a
    #    masked partial hidden block, then a second apply pass.
    x4 = jax.random.normal(jax.random.PRNGKey(3), (4, 16, 896), dtype=jnp.float32)
    y4 = jax.block_until_ready(scale_norm(x4, g, eps=1e-5, target_tile_bytes=16 * 1024))
    assert jnp.allclose(y4, scale_norm_ref(x4, g), atol=1e-5, rtol=1e-5), \
        "mismatch (wide hidden)"

    print("KERNEL_OK")
</pallas_src>

<mosaic_0001>
module attributes {stable_mosaic.version = 11 : i64} {
  func.func @_scale_norm_kernel(%arg0: i32, %arg1: memref<1xf32, #tpu.memory_space<smem>>, %arg2: memref<16x32xf32, #tpu.memory_space<vmem>>, %arg3: memref<16x32xf32, #tpu.memory_space<vmem>>) attributes {dimension_semantics = [#tpu.dimension_semantics<parallel>], iteration_bounds = array<i64: 1>, scalar_prefetch = 0 : i64, scratch_operands = 0 : i64, tpu.core_type = #tpu.core_type<tc>, window_params = [{transform_indices = @transform_0, window_bounds = array<i64: 1>}, {transform_indices = @transform_1, window_bounds = array<i64: 16, 32>}, {transform_indices = @transform_2, window_bounds = array<i64: 16, 32>}]} {
    %c0 = arith.constant 0 : index
    %c0_0 = arith.constant 0 : index
    %0 = vector.load %arg2[%c0, %c0_0] : memref<16x32xf32, #tpu.memory_space<vmem>>, vector<16x32xf32>
    %1 = arith.mulf %0, %0 : vector<16x32xf32>
    %cst = arith.constant dense<0.000000e+00> : vector<16xf32>
    %2 = vector.multi_reduction <add>, %1, %cst [1] : vector<16x32xf32> to vector<16xf32>
    %3 = vector.shape_cast %2 : vector<16xf32> to vector<16x1xf32>
    %c0_1 = arith.constant 0 : index
    %4 = memref.load %arg1[%c0_1] : memref<1xf32, #tpu.memory_space<smem>>
    %cst_2 = arith.constant 1.000000e-10 : f32
    %5 = vector.broadcast %cst_2 : f32 to vector<16x1xf32>
    %6 = arith.maximumf %3, %5 : vector<16x1xf32>
    %7 = math.rsqrt %6 : vector<16x1xf32>
    %8 = vector.broadcast %4 : f32 to vector<16x1xf32>
    %9 = arith.mulf %8, %7 : vector<16x1xf32>
    %10 = vector.broadcast %9 : vector<16x1xf32> to vector<16x32xf32>
    %11 = arith.mulf %0, %10 : vector<16x32xf32>
    %c0_3 = arith.constant 0 : index
    %c0_4 = arith.constant 0 : index
    %12 = vector.load %arg3[%c0_3, %c0_4] : memref<16x32xf32, #tpu.memory_space<vmem>>, vector<16x32xf32>
    tpu.vector_store %arg3[%c0_3, %c0_4], %11 {strides = array<i32>} : memref<16x32xf32, #tpu.memory_space<vmem>>, vector<16x32xf32>,
    return
  }
  func.func @transform_0(%arg0: i32) -> i32 {
    %c0_i32 = arith.constant 0 : i32
    %c0_i32_0 = arith.constant 0 : i32
    return %c0_i32 : i32
  }
  func.func @transform_1(%arg0: i32) -> (i32, i32) {
    %c0_i32 = arith.constant 0 : i32
    %c0_i32_0 = arith.constant 0 : i32
    return %arg0, %c0_i32 : i32, i32
  }
  func.func @transform_2(%arg0: i32) -> (i32, i32) {
    %c0_i32 = arith.constant 0 : i32
    %c0_i32_0 = arith.constant 0 : i32
    return %arg0, %c0_i32 : i32, i32
  }
}

</mosaic_0001>

<llo_original>
// kernel: tpu_custom_call.1
$region0: #{tpu_custom_call.1}
  #allocation0 [shape = 'u32[]', space=smem, size = 0x4, offset = 0x4, fixed_abs, tag = 'smem constant byte address 0x4 - core index']
  #allocation1 [shape = 'u32[72,128]{1,0:T(1,128)}', space=vmem, size = 0x9000, scoped, tag = 'internal scratch']
  #allocation2 [shape = 'f32[1]{0:T(128)S(6)}', space=smem, size = 0x200, scoped, tag = 'scoped memory for tpu_custom_call.1']
  %s0 = inlined_call_operand.<no memory space> [shape: f32[1], index: 0, kind: input, shape index: {}]
  %s1 = inlined_call_operand.hbm [shape: f32[16,32], index: 1, kind: input, shape index: {}]
  %s2 = inlined_call_operand.hbm [shape: f32[16,32], index: 2, kind: output, shape index: {}]
  %s3 = sld [smem:[#allocation0]]
  $region22: #{tpu_custom_call.1} parent=0
    _
  %s5 = ssub.s32 1, %s3
  %s6 = scalar_select 0, %s5, %s3
  %7 = sst [smem:[#allocation2]] %s0
  $region1: #{tpu_custom_call.1} parent=0
    #allocation3 [shape = 'u8[8192]{0}', space=vmem, size = 0x2000, scoped, tag = 'input window, operand 1, single buffered']
    #allocation4 [shape = 's32[1]{0}', space=sflag, size = 0x4, scoped, tag = 'scoped memory for tpu_custom_call.1']
    #allocation5 [shape = 's32[1]{0}', space=sflag, size = 0x4, scoped, tag = 'scoped memory for tpu_custom_call.1']
    #allocation6 [shape = 'u8[8192]{0}', space=vmem, size = 0x2000, scoped, tag = 'output window, operand 0, single buffered']
    %8 = vsyncpa [#allocation4], 0
    %9 = vsyncpa [#allocation5], 0
    // Predicated region
    $region2: #{tpu_custom_call.1} parent=1 // pred_check
      _
    $region3: #{tpu_custom_call.1} parent=1 // pred_check_branch
      %11 = sbr.rel (0) target = $region5
    $region4: #{tpu_custom_call.1} parent=1 // pred_region
      _
    $region5: #{tpu_custom_call.1} parent=1 // pred_fallthru
      _
    // Predicated region
    $region6: #{tpu_custom_call.1} parent=1 // pred_check
      _
    $region7: #{tpu_custom_call.1} parent=1 // pred_check_branch
      %13 = sbr.rel (0) target = $region9
    $region8: #{tpu_custom_call.1} parent=1 // pred_region
      %15 = vsyncadd [#allocation4], 0
      %s16 = sshll.u32 %s1, 4
      %s17 = int_to_ptr.hbm [resolvable:$true] %s16
      %s18 = sshll.u32 [#allocation3], 4
      %s19 = int_to_ptr.vmem [resolvable:$true] %s18
      %24 = dma.hbm_to_vmem [thread:$0]  %s17, 256, %s19, [#allocation4], 128, 128, 8
    $region9: #{tpu_custom_call.1} parent=1 // pred_fallthru
      _
    // Predicated region
    $region10: #{tpu_custom_call.1} parent=1 // pred_check
      _
    $region11: #{tpu_custom_call.1} parent=1 // pred_check_branch
      %26 = sbr.rel (0) target = $region13
    $region12: #{tpu_custom_call.1} parent=1 // pred_region
      %28 = dma.done [#allocation4], 256
    $region13: #{tpu_custom_call.1} parent=1 // pred_fallthru
      _
    %v29 = vld [vmem:[#allocation3] sm:$0xff]
    %v30 = vld [vmem:[#allocation3 + $0x8] sm:$0xff]
    %v31 = vmul.f32 %v29, %v29
    %v32 = vmul.f32 %v30, %v30
    %vm33 = vcmask 261120
    %v34 = vsel %vm33, %v31, 0.0
    %35 = vadd.xlane.f32.xlu0 %v34
    %v36 = vpop.xlane.xlu0 %35
    %v37 = vsel %vm33, %v32, 0.0
    %38 = vadd.xlane.f32.xlu0 %v37
    %v39 = vpop.xlane.xlu0 %38
    %s40 = sld [smem:[#allocation2]]
    %v41 = vmax.f32 %v36, 1e-10
    %v42 = vmax.f32 %v39, 1e-10
    %v43 = vrsqrt.pop %v41
    %v44 = vmul.f32 %v43, %v41
    %v45 = vmul.f32 %v44, %v43
    %v46 = vmul.f32 0.5, %v45
    %v47 = vsub.f32 1.5, %v46
    %v48 = vmul.f32 %v43, %v47
    %vm49 = vweird.f32 %v41
    %vm50 = vweird.f32 %v43
    %vm51 = vmor %vm49, %vm50
    %v52 = vsel %vm51, %v43, %v48
    %v53 = vrsqrt.pop %v42
    %v54 = vmul.f32 %v53, %v42
    %v55 = vmul.f32 %v54, %v53
    %v56 = vmul.f32 0.5, %v55
    %v57 = vsub.f32 1.5, %v56
    %v58 = vmul.f32 %v53, %v57
    %vm59 = vweird.f32 %v42
    %vm60 = vweird.f32 %v53
    %vm61 = vmor %vm59, %vm60
    %v62 = vsel %vm61, %v53, %v58
    %v63 = vstv %s40
    %v64 = vmul.f32 %v63, %v52
    %v65 = vmul.f32 %v63, %v62
    %v66 = vmul.f32 %v29, %v64
    %v67 = vmul.f32 %v30, %v65
    %68 = vst.msk [vmem:[#allocation6] sm:$0xff] %vm33, %v66
    %69 = vst.msk [vmem:[#allocation6 + $0x8] sm:$0xff] %vm33, %v67
    // Predicated region
    $region14: #{tpu_custom_call.1} parent=1 // pred_check
      _
    $region15: #{tpu_custom_call.1} parent=1 // pred_check_branch
      %71 = sbr.rel (0) target = $region17
    $region16: #{tpu_custom_call.1} parent=1 // pred_region
      %73 = vsyncadd [#allocation5], 0
      %s74 = sshll.u32 [#allocation6], 4
      %s75 = int_to_ptr.vmem [resolvable:$true] %s74
      %s76 = sshll.u32 %s2, 4
      %s77 = int_to_ptr.hbm [resolvable:$true] %s76
      %82 = dma.vmem_to_hbm [thread:$0]  %s75, 256, %s77, [#allocation5], 128, 128, 8
    $region17: #{tpu_custom_call.1} parent=1 // pred_fallthru
      _
    // Predicated region
    $region18: #{tpu_custom_call.1} parent=1 // pred_check
      _
    $region19: #{tpu_custom_call.1} parent=1 // pred_check_branch
      %84 = sbr.rel (0) target = $region21
    $region20: #{tpu_custom_call.1} parent=1 // pred_region
      %86 = dma.done [#allocation5], 256
    $region21: #{tpu_custom_call.1} parent=1 // pred_fallthru
      _
    %87 = vsyncpa [#allocation4], 1
    %88 = vsyncpa [#allocation5], 1

</llo_original>
